<compile_context>
chip_gen: v6e
topology: v6e:2x2x1
jax: 0.10.0
libtpu: 0.0.40
codegen_flags: <defaults>
</compile_context>

<pallas_src>
import functools

import jax
import jax.numpy as jnp
from jax.experimental import pallas as pl
from jax.experimental.pallas import tpu as pltpu


def _sseu_kernel(x_ref, wc_ref, s0_ref, t0_ref, w1_ref, sh1_ref, w2_ref, b2_ref,
                 out_ref, *, radix, channels, in_eps):
    # x_ref:   (Bt, Cin, N)   batch block, spatial flattened onto lanes (bf16/f32)
    # wc_ref:  (CR, Cin)      block-diagonal grouped-conv weight (same dtype as x)
    # s0_ref:  (CR, 1)        folded eval BatchNorm0 scale                    (f32)
    # t0_ref:  (CR, 1)        folded eval BatchNorm0 shift                    (f32)
    # w1_ref:  (channels, IC) fc1 weight, BN1-scaled, pre-transposed          (f32)
    # sh1_ref: (1, IC)        fc1 bias + BN1 shift, folded                    (f32)
    # w2_ref:  (IC, CR)       fc2 weight, pre-transposed                      (f32)
    # b2_ref:  (1, CR)        fc2 bias                                        (f32)
    # out_ref: (Bt, radix*CR)
    bt = x_ref.shape[0]
    cr, cin = wc_ref.shape
    n = x_ref.shape[-1]
    inv_n = 1.0 / n

    x = x_ref[...]                                            # (Bt, Cin, N)

    # Grouped 1x1 conv as one block-diagonal batched matmul on the MXU; N stays
    # on lanes and nothing is transposed in-kernel (tiny weight broadcast is
    # hoisted, once per grid step).
    wc = jnp.broadcast_to(wc_ref[...], (bt, cr, cin))         # (Bt, CR, Cin)
    h = jax.lax.dot_general(
        wc, x,
        dimension_numbers=(((2,), (1,)), ((0,), (0,))),
        preferred_element_type=jnp.float32)                   # (Bt, CR, N) f32

    # One-pass InstanceNorm stats: var = E[h^2] - E[h]^2 (clamped against the
    # cancellation corner case), fused with folded eval BN0 into a*h + b.
    hsum = jnp.sum(h, axis=-1, keepdims=True)                 # (Bt, CR, 1)
    hsqsum = jnp.sum(h * h, axis=-1, keepdims=True)           # (Bt, CR, 1)
    mean = hsum * inv_n
    var = jnp.maximum(hsqsum * inv_n - mean * mean, 0.0)
    a = s0_ref[...] * jax.lax.rsqrt(var + in_eps)             # (Bt, CR, 1)
    b = t0_ref[...] - mean * a

    # Per-radix squeeze-excite on (Bt, channels, N) slices of h; the full
    # activated (Bt, CR, N) tensor is never materialized.  radix is small and
    # static -> unrolled Python loop.
    parts = []
    for r in range(radix):
        sl = slice(r * channels, (r + 1) * channels)
        hr = jnp.maximum(h[:, sl, :] * a[:, sl, :] + b[:, sl, :], 0.0)
        gap = jnp.sum(hr, axis=-1) * inv_n                    # (Bt, channels)
        # fc1 + folded eval BatchNorm1 + ReLU (weights pre-scaled/pre-transposed).
        z = jnp.maximum(
            jnp.dot(gap, w1_ref[...], preferred_element_type=jnp.float32)
            + sh1_ref[...], 0.0)                              # (Bt, IC)
        # fc2 -> sigmoid attention.  torch multiplies it with the fc1/BN1/ReLU
        # output (requires IC == CR).
        logits = (jnp.dot(z, w2_ref[...], preferred_element_type=jnp.float32)
                  + b2_ref[...])                              # (Bt, CR)
        att = 1.0 / (1.0 + jnp.exp(-logits))
        parts.append(att * z)
    # Single lane-dense store of the merged radix outputs.
    out_ref[...] = jnp.concatenate(parts, axis=-1).astype(out_ref.dtype)


def _vmem_budget_bytes():
    """(tiling budget, scoped vmem limit) derived from the chip generation.

    v5e/v6e (128 MiB physical): ~48 MiB budget; v7x (64 MiB): ~24 MiB budget.
    The scoped limit gets a small headroom above the budget and is capped at
    physical capacity.
    """
    try:
        cap = int(pltpu.get_tpu_info().vmem_capacity_bytes)
    except Exception:  # no TPU info available -> conservative (v7x-sized)
        cap = 64 << 20
    budget = min(cap * 3 // 8, 48 << 20)
    limit = min(cap, budget + (16 << 20))
    return budget, limit


def _pick_batch_block(B, Cin, CR, channels, N, x_itemsize, vmem_budget_bytes):
    """Largest batch block Bt that fits the VMEM budget.

    Counts the double-buffered x block plus all simultaneously-live f32
    intermediates (h, h*h, one per-radix activated slice); sublane dims are
    padded to 8 and the lane dim to 128 to match the compiler's layout.  Bt is
    kept a multiple of 8 (or == B) so output stores stay sublane-aligned, and
    for B >= 16 it is capped to guarantee >= 2 grid steps (both v7x cores).
    """
    def pad8(v):
        return max(8 * ((v + 7) // 8), 8)

    n_pad = 128 * ((N + 127) // 128)
    per_batch = (2 * pad8(Cin) * n_pad * x_itemsize               # x, double-buffered
                 + (2 * pad8(CR) + pad8(channels)) * n_pad * 4)   # h, h*h, hr slice
    cap = max(1, vmem_budget_bytes // per_batch)
    if B >= 16:
        cap = min(cap, max(8, ((B + 1) // 2) // 8 * 8))           # >= 2 grid steps
    if cap >= B:
        return B
    return max((cap // 8) * 8, 1)


def sseu_forward(x, p, *, radix, channels, bn_eps=1e-5, in_eps=1e-5,
                 operand_dtype=jnp.bfloat16, block_batch=None):
    """x: (B, Cin, H, W) float32.  Returns (B, radix*channels*radix, 1, 1).

    `operand_dtype` is used for the x / grouped-conv-weight MXU operands
    (bf16 halves HBM traffic and x's VMEM footprint); accumulation and all
    post-conv math stay float32.  Pass jnp.float32 for bit-closer numerics.
    """
    B, Cin, H, W = x.shape
    N = H * W
    CR = channels * radix
    cin_g = Cin // radix
    IC = p["fc1_w"].shape[0]
    assert radix >= 2, "radix == 1 uses a different torch code path (not implemented)"
    assert Cin % radix == 0, "grouped conv requires in_channels % radix == 0"
    # torch multiplies sigmoid(fc2(.)) [CR channels] with the fc1/BN1/ReLU
    # output [IC channels]; that broadcast only works when IC == CR.
    assert IC == CR, "SSEU forward requires inter_channels == channels * radix"
    f32 = jnp.float32

    # Block-diagonal weight implementing the groups=radix 1x1 conv.
    wg = p["conv_w"][:, :, 0, 0].astype(f32)                       # (CR, cin_g)
    wc = jnp.zeros((CR, Cin), f32)
    for r in range(radix):
        wc = wc.at[r * channels:(r + 1) * channels,
                   r * cin_g:(r + 1) * cin_g].set(wg[r * channels:(r + 1) * channels])
    # conv bias intentionally dropped: InstanceNorm removes the per-(b, c)
    # spatial mean, so a per-channel constant bias cancels exactly.

    # Eval-mode BatchNorm0 folded into per-channel scale/shift.
    s0 = (p["bn0_gamma"] * jax.lax.rsqrt(p["bn0_var"] + bn_eps)).astype(f32)
    t0 = (p["bn0_beta"] - p["bn0_mean"] * s0).astype(f32)

    # fc1 (+bias) and eval-mode BatchNorm1 folded; pre-transposed.
    s1 = (p["bn1_gamma"] * jax.lax.rsqrt(p["bn1_var"] + bn_eps)).astype(f32)
    w1 = (p["fc1_w"][:, :, 0, 0].astype(f32) * s1[:, None]).T      # (channels, IC)
    sh1 = (p["fc1_b"].astype(f32) * s1
           + p["bn1_beta"] - p["bn1_mean"] * s1).reshape(1, IC).astype(f32)
    w2 = p["fc2_w"][:, :, 0, 0].astype(f32).T                       # (IC, CR)
    b2 = p["fc2_b"].astype(f32).reshape(1, CR)

    x3 = x.reshape(B, Cin, N).astype(operand_dtype)
    wc = wc.astype(operand_dtype)

    budget, vmem_limit = _vmem_budget_bytes()
    Bt = (block_batch if block_batch is not None else
          _pick_batch_block(B, Cin, CR, channels, N,
                            jnp.dtype(operand_dtype).itemsize, budget))
    RCR = radix * CR

    kernel = functools.partial(_sseu_kernel, radix=radix, channels=channels,
                               in_eps=in_eps)
    out = pl.pallas_call(
        kernel,
        out_shape=jax.ShapeDtypeStruct((B, RCR), f32),
        grid_spec=pltpu.PrefetchScalarGridSpec(
            num_scalar_prefetch=0,
            grid=(pl.cdiv(B, Bt),),
            in_specs=[
                pl.BlockSpec((Bt, Cin, N), lambda i: (i, 0, 0)),
                pl.BlockSpec((CR, Cin), lambda i: (0, 0)),
                pl.BlockSpec((CR, 1), lambda i: (0, 0)),
                pl.BlockSpec((CR, 1), lambda i: (0, 0)),
                pl.BlockSpec((channels, IC), lambda i: (0, 0)),
                pl.BlockSpec((1, IC), lambda i: (0, 0)),
                pl.BlockSpec((IC, CR), lambda i: (0, 0)),
                pl.BlockSpec((1, CR), lambda i: (0, 0)),
            ],
            out_specs=pl.BlockSpec((Bt, RCR), lambda i: (i, 0)),
        ),
        compiler_params=pltpu.CompilerParams(
            dimension_semantics=("parallel",),
            vmem_limit_bytes=vmem_limit),
    )(x3, wc, s0.reshape(CR, 1), t0.reshape(CR, 1), w1, sh1, w2, b2)

    # torch: out = cat([att_r * z_r for r], dim=1) -> (B, radix*CR, 1, 1)
    return out.reshape(B, RCR, 1, 1)


def sseu_reference(x, p, *, radix, channels, bn_eps=1e-5, in_eps=1e-5):
    """Pure-JAX f32 reference mirroring the torch forward (eval-mode BatchNorm)."""
    B, Cin, H, W = x.shape
    CR = channels * radix
    cin_g = Cin // radix
    w = p["conv_w"][:, :, 0, 0].astype(jnp.float32)                  # (CR, cin_g)
    groups = []
    for r in range(radix):
        xg = x[:, r * cin_g:(r + 1) * cin_g].astype(jnp.float32)     # (B, cin_g, H, W)
        wg = w[r * channels:(r + 1) * channels]                      # (channels, cin_g)
        groups.append(jnp.einsum("oc,bchw->bohw", wg, xg))
    h = jnp.concatenate(groups, axis=1) + p["conv_b"][None, :, None, None]
    mu = jnp.mean(h, axis=(2, 3), keepdims=True)
    var = jnp.mean((h - mu) ** 2, axis=(2, 3), keepdims=True)
    h = (h - mu) / jnp.sqrt(var + in_eps)
    s0 = p["bn0_gamma"] / jnp.sqrt(p["bn0_var"] + bn_eps)
    h = h * s0[None, :, None, None] + (p["bn0_beta"] - p["bn0_mean"] * s0)[None, :, None, None]
    h = jnp.maximum(h, 0.0)
    s1 = p["bn1_gamma"] / jnp.sqrt(p["bn1_var"] + bn_eps)
    outs = []
    for r in range(radix):
        gap = jnp.mean(h[:, r * channels:(r + 1) * channels], axis=(2, 3))  # (B, channels)
        y = gap @ p["fc1_w"][:, :, 0, 0].T + p["fc1_b"]
        y = y * s1 + (p["bn1_beta"] - p["bn1_mean"] * s1)
        y = jnp.maximum(y, 0.0)                                             # (B, IC)
        att = jax.nn.sigmoid(y @ p["fc2_w"][:, :, 0, 0].T + p["fc2_b"])     # (B, CR)
        outs.append(att * y)
    return jnp.concatenate(outs, axis=1)[:, :, None, None]


if __name__ == "__main__":
    # Small shapes consistent with the module. inter_channels must equal
    # channels*radix for the torch forward's broadcast to work:
    #   in_channels=4, radix=2, reduction_factor=4 -> inter = max(2, 32) = 32
    #   channels=16 -> channels*radix = 32.  OK.
    B, Cin, H, W = 2, 4, 16, 16
    radix, channels, reduction_factor = 2, 16, 4
    CR = channels * radix
    IC = max(Cin * radix // reduction_factor, 32)
    assert IC == CR

    key = jax.random.PRNGKey(0)
    ks = jax.random.split(key, 16)
    x = jax.random.normal(ks[0], (B, Cin, H, W), dtype=jnp.float32)

    # Deterministic synthetic parameters (no checkpoint load).
    p = {
        "conv_w": 0.5 * jax.random.normal(ks[1], (CR, Cin // radix, 1, 1), jnp.float32),
        "conv_b": 0.1 * jax.random.normal(ks[2], (CR,), jnp.float32),
        "bn0_gamma": 1.0 + 0.1 * jax.random.normal(ks[3], (CR,), jnp.float32),
        "bn0_beta": 0.1 * jax.random.normal(ks[4], (CR,), jnp.float32),
        "bn0_mean": 0.1 * jax.random.normal(ks[5], (CR,), jnp.float32),
        "bn0_var": 0.5 + jax.random.uniform(ks[6], (CR,), jnp.float32),
        "fc1_w": 0.2 * jax.random.normal(ks[7], (IC, channels, 1, 1), jnp.float32),
        "fc1_b": 0.1 * jax.random.normal(ks[8], (IC,), jnp.float32),
        "bn1_gamma": 1.0 + 0.1 * jax.random.normal(ks[9], (IC,), jnp.float32),
        "bn1_beta": 0.1 * jax.random.normal(ks[10], (IC,), jnp.float32),
        "bn1_mean": 0.1 * jax.random.normal(ks[11], (IC,), jnp.float32),
        "bn1_var": 0.5 + jax.random.uniform(ks[12], (IC,), jnp.float32),
        "fc2_w": 0.2 * jax.random.normal(ks[13], (CR, IC, 1, 1), jnp.float32),
        "fc2_b": 0.1 * jax.random.normal(ks[14], (CR,), jnp.float32),
    }

    out = sseu_forward(x, p, radix=radix, channels=channels)
    out = jax.block_until_ready(out)
    ref = sseu_reference(x, p, radix=radix, channels=channels)

    assert out.shape == (B, radix * CR, 1, 1), out.shape
    max_err = float(jnp.max(jnp.abs(out - ref)))
    # Tolerance is set by the deliberate bf16 cast of the conv operands
    # (quantization error ~1e-3 through the pipeline) plus margin for the
    # TPU MXU precision mode on the small f32 matmuls and transcendentals.
    assert jnp.allclose(out, ref, atol=2e-2, rtol=2e-2), max_err
    print("KERNEL_OK")
</pallas_src>

<mosaic_0001>
module attributes {stable_mosaic.version = 11 : i64} {
  func.func @_sseu_kernel(%arg0: i32, %arg1: memref<2x4x256xbf16, #tpu.memory_space<vmem>>, %arg2: memref<32x4xbf16, #tpu.memory_space<vmem>>, %arg3: memref<32x1xf32, #tpu.memory_space<vmem>>, %arg4: memref<32x1xf32, #tpu.memory_space<vmem>>, %arg5: memref<16x32xf32, #tpu.memory_space<vmem>>, %arg6: memref<1x32xf32, #tpu.memory_space<vmem>>, %arg7: memref<32x32xf32, #tpu.memory_space<vmem>>, %arg8: memref<1x32xf32, #tpu.memory_space<vmem>>, %arg9: memref<2x64xf32, #tpu.memory_space<vmem>>) attributes {dimension_semantics = [#tpu.dimension_semantics<parallel>], iteration_bounds = array<i64: 1>, scalar_prefetch = 0 : i64, scratch_operands = 0 : i64, tpu.core_type = #tpu.core_type<tc>, window_params = [{transform_indices = @transform_0, window_bounds = array<i64: 2, 4, 256>}, {pipeline_mode = #tpu.pipeline_mode<synchronous>, transform_indices = @transform_1, window_bounds = array<i64: 32, 4>}, {pipeline_mode = #tpu.pipeline_mode<synchronous>, transform_indices = @transform_2, window_bounds = array<i64: 32, 1>}, {pipeline_mode = #tpu.pipeline_mode<synchronous>, transform_indices = @transform_3, window_bounds = array<i64: 32, 1>}, {pipeline_mode = #tpu.pipeline_mode<synchronous>, transform_indices = @transform_4, window_bounds = array<i64: 16, 32>}, {pipeline_mode = #tpu.pipeline_mode<synchronous>, transform_indices = @transform_5, window_bounds = array<i64: 1, 32>}, {pipeline_mode = #tpu.pipeline_mode<synchronous>, transform_indices = @transform_6, window_bounds = array<i64: 32, 32>}, {pipeline_mode = #tpu.pipeline_mode<synchronous>, transform_indices = @transform_7, window_bounds = array<i64: 1, 32>}, {transform_indices = @transform_8, window_bounds = array<i64: 2, 64>}]} {
    %c0 = arith.constant 0 : index
    %c0_0 = arith.constant 0 : index
    %c0_1 = arith.constant 0 : index
    %0 = vector.load %arg1[%c0, %c0_0, %c0_1] : memref<2x4x256xbf16, #tpu.memory_space<vmem>>, vector<2x4x256xbf16>
    %c0_2 = arith.constant 0 : index
    %c0_3 = arith.constant 0 : index
    %1 = vector.load %arg2[%c0_2, %c0_3] : memref<32x4xbf16, #tpu.memory_space<vmem>>, vector<32x4xbf16>
    %2 = vector.shape_cast %1 : vector<32x4xbf16> to vector<1x32x4xbf16>
    %3 = vector.broadcast %2 : vector<1x32x4xbf16> to vector<2x32x4xbf16>
    %cst = arith.constant dense<0.000000e+00> : vector<2x32x256xf32>
    %4 = tpu.matmul %3, %0, %cst {dimension_numbers = #tpu.dot_dimension_numbers<[2], [1], [1], [2], [0, 0, 0, 1, 1, 2], [0], [0]>} : vector<2x32x4xbf16>, vector<2x4x256xbf16>, vector<2x32x256xf32> -> vector<2x32x256xf32>
    %cst_4 = arith.constant dense<0.000000e+00> : vector<2x32xf32>
    %5 = vector.multi_reduction <add>, %4, %cst_4 [2] : vector<2x32x256xf32> to vector<2x32xf32>
    %6 = vector.shape_cast %5 : vector<2x32xf32> to vector<2x32x1xf32>
    %7 = arith.mulf %4, %4 : vector<2x32x256xf32>
    %cst_5 = arith.constant dense<0.000000e+00> : vector<2x32xf32>
    %8 = vector.multi_reduction <add>, %7, %cst_5 [2] : vector<2x32x256xf32> to vector<2x32xf32>
    %9 = vector.shape_cast %8 : vector<2x32xf32> to vector<2x32x1xf32>
    %cst_6 = arith.constant 3.906250e-03 : f32
    %10 = vector.broadcast %cst_6 : f32 to vector<2x32x1xf32>
    %11 = arith.mulf %6, %10 : vector<2x32x1xf32>
    %cst_7 = arith.constant 3.906250e-03 : f32
    %12 = vector.broadcast %cst_7 : f32 to vector<2x32x1xf32>
    %13 = arith.mulf %9, %12 : vector<2x32x1xf32>
    %14 = arith.mulf %11, %11 : vector<2x32x1xf32>
    %15 = arith.subf %13, %14 : vector<2x32x1xf32>
    %cst_8 = arith.constant 0.000000e+00 : f32
    %16 = vector.broadcast %cst_8 : f32 to vector<2x32x1xf32>
    %17 = arith.maximumf %15, %16 : vector<2x32x1xf32>
    %c0_9 = arith.constant 0 : index
    %c0_10 = arith.constant 0 : index
    %18 = vector.load %arg3[%c0_9, %c0_10] : memref<32x1xf32, #tpu.memory_space<vmem>>, vector<32x1xf32>
    %cst_11 = arith.constant 9.99999974E-6 : f32
    %19 = vector.broadcast %cst_11 : f32 to vector<2x32x1xf32>
    %20 = arith.addf %17, %19 : vector<2x32x1xf32>
    %21 = math.rsqrt %20 : vector<2x32x1xf32>
    %22 = vector.shape_cast %18 : vector<32x1xf32> to vector<1x32x1xf32>
    %23 = vector.broadcast %22 : vector<1x32x1xf32> to vector<2x32x1xf32>
    %24 = arith.mulf %23, %21 : vector<2x32x1xf32>
    %c0_12 = arith.constant 0 : index
    %c0_13 = arith.constant 0 : index
    %25 = vector.load %arg4[%c0_12, %c0_13] : memref<32x1xf32, #tpu.memory_space<vmem>>, vector<32x1xf32>
    %26 = arith.mulf %11, %24 : vector<2x32x1xf32>
    %27 = vector.shape_cast %25 : vector<32x1xf32> to vector<1x32x1xf32>
    %28 = vector.broadcast %27 : vector<1x32x1xf32> to vector<2x32x1xf32>
    %29 = arith.subf %28, %26 : vector<2x32x1xf32>
    %30 = vector.extract_strided_slice %4 {offsets = [0, 0, 0], sizes = [2, 16, 256], strides = [1, 1, 1]} : vector<2x32x256xf32> to vector<2x16x256xf32>
    %31 = vector.extract_strided_slice %24 {offsets = [0, 0, 0], sizes = [2, 16, 1], strides = [1, 1, 1]} : vector<2x32x1xf32> to vector<2x16x1xf32>
    %32 = vector.broadcast %31 : vector<2x16x1xf32> to vector<2x16x256xf32>
    %33 = arith.mulf %30, %32 : vector<2x16x256xf32>
    %34 = vector.extract_strided_slice %29 {offsets = [0, 0, 0], sizes = [2, 16, 1], strides = [1, 1, 1]} : vector<2x32x1xf32> to vector<2x16x1xf32>
    %35 = vector.broadcast %34 : vector<2x16x1xf32> to vector<2x16x256xf32>
    %36 = arith.addf %33, %35 : vector<2x16x256xf32>
    %cst_14 = arith.constant 0.000000e+00 : f32
    %37 = vector.broadcast %cst_14 : f32 to vector<2x16x256xf32>
    %38 = arith.maximumf %36, %37 : vector<2x16x256xf32>
    %cst_15 = arith.constant dense<0.000000e+00> : vector<2x16xf32>
    %39 = vector.multi_reduction <add>, %38, %cst_15 [2] : vector<2x16x256xf32> to vector<2x16xf32>
    %cst_16 = arith.constant 3.906250e-03 : f32
    %40 = vector.broadcast %cst_16 : f32 to vector<2x16xf32>
    %41 = arith.mulf %39, %40 : vector<2x16xf32>
    %c0_17 = arith.constant 0 : index
    %c0_18 = arith.constant 0 : index
    %42 = vector.load %arg5[%c0_17, %c0_18] : memref<16x32xf32, #tpu.memory_space<vmem>>, vector<16x32xf32>
    %cst_19 = arith.constant dense<0.000000e+00> : vector<2x32xf32>
    %43 = tpu.matmul %41, %42, %cst_19 {dimension_numbers = #tpu.dot_dimension_numbers<[1], [0], [0], [1], [0, 0, 1, 1], [], []>} : vector<2x16xf32>, vector<16x32xf32>, vector<2x32xf32> -> vector<2x32xf32>
    %c0_20 = arith.constant 0 : index
    %c0_21 = arith.constant 0 : index
    %44 = vector.load %arg6[%c0_20, %c0_21] : memref<1x32xf32, #tpu.memory_space<vmem>>, vector<1x32xf32>
    %45 = vector.broadcast %44 : vector<1x32xf32> to vector<2x32xf32>
    %46 = arith.addf %43, %45 : vector<2x32xf32>
    %cst_22 = arith.constant 0.000000e+00 : f32
    %47 = vector.broadcast %cst_22 : f32 to vector<2x32xf32>
    %48 = arith.maximumf %46, %47 : vector<2x32xf32>
    %c0_23 = arith.constant 0 : index
    %c0_24 = arith.constant 0 : index
    %49 = vector.load %arg7[%c0_23, %c0_24] : memref<32x32xf32, #tpu.memory_space<vmem>>, vector<32x32xf32>
    %cst_25 = arith.constant dense<0.000000e+00> : vector<2x32xf32>
    %50 = tpu.matmul %48, %49, %cst_25 {dimension_numbers = #tpu.dot_dimension_numbers<[1], [0], [0], [1], [0, 0, 1, 1], [], []>} : vector<2x32xf32>, vector<32x32xf32>, vector<2x32xf32> -> vector<2x32xf32>
    %c0_26 = arith.constant 0 : index
    %c0_27 = arith.constant 0 : index
    %51 = vector.load %arg8[%c0_26, %c0_27] : memref<1x32xf32, #tpu.memory_space<vmem>>, vector<1x32xf32>
    %52 = vector.broadcast %51 : vector<1x32xf32> to vector<2x32xf32>
    %53 = arith.addf %50, %52 : vector<2x32xf32>
    %cst_28 = arith.constant 0.000000e+00 : f32
    %54 = vector.broadcast %cst_28 : f32 to vector<2x32xf32>
    %55 = arith.subf %54, %53 : vector<2x32xf32>
    %56 = math.exp %55 : vector<2x32xf32>
    %cst_29 = arith.constant 1.000000e+00 : f32
    %57 = vector.broadcast %cst_29 : f32 to vector<2x32xf32>
    %58 = arith.addf %57, %56 : vector<2x32xf32>
    %cst_30 = arith.constant 1.000000e+00 : f32
    %59 = vector.broadcast %cst_30 : f32 to vector<2x32xf32>
    %60 = arith.divf %59, %58 : vector<2x32xf32>
    %61 = arith.mulf %60, %48 : vector<2x32xf32>
    %62 = vector.extract_strided_slice %4 {offsets = [0, 16, 0], sizes = [2, 16, 256], strides = [1, 1, 1]} : vector<2x32x256xf32> to vector<2x16x256xf32>
    %63 = vector.extract_strided_slice %24 {offsets = [0, 16, 0], sizes = [2, 16, 1], strides = [1, 1, 1]} : vector<2x32x1xf32> to vector<2x16x1xf32>
    %64 = vector.broadcast %63 : vector<2x16x1xf32> to vector<2x16x256xf32>
    %65 = arith.mulf %62, %64 : vector<2x16x256xf32>
    %66 = vector.extract_strided_slice %29 {offsets = [0, 16, 0], sizes = [2, 16, 1], strides = [1, 1, 1]} : vector<2x32x1xf32> to vector<2x16x1xf32>
    %67 = vector.broadcast %66 : vector<2x16x1xf32> to vector<2x16x256xf32>
    %68 = arith.addf %65, %67 : vector<2x16x256xf32>
    %cst_31 = arith.constant 0.000000e+00 : f32
    %69 = vector.broadcast %cst_31 : f32 to vector<2x16x256xf32>
    %70 = arith.maximumf %68, %69 : vector<2x16x256xf32>
    %cst_32 = arith.constant dense<0.000000e+00> : vector<2x16xf32>
    %71 = vector.multi_reduction <add>, %70, %cst_32 [2] : vector<2x16x256xf32> to vector<2x16xf32>
    %cst_33 = arith.constant 3.906250e-03 : f32
    %72 = vector.broadcast %cst_33 : f32 to vector<2x16xf32>
    %73 = arith.mulf %71, %72 : vector<2x16xf32>
    %c0_34 = arith.constant 0 : index
    %c0_35 = arith.constant 0 : index
    %74 = vector.load %arg5[%c0_34, %c0_35] : memref<16x32xf32, #tpu.memory_space<vmem>>, vector<16x32xf32>
    %cst_36 = arith.constant dense<0.000000e+00> : vector<2x32xf32>
    %75 = tpu.matmul %73, %74, %cst_36 {dimension_numbers = #tpu.dot_dimension_numbers<[1], [0], [0], [1], [0, 0, 1, 1], [], []>} : vector<2x16xf32>, vector<16x32xf32>, vector<2x32xf32> -> vector<2x32xf32>
    %c0_37 = arith.constant 0 : index
    %c0_38 = arith.constant 0 : index
    %76 = vector.load %arg6[%c0_37, %c0_38] : memref<1x32xf32, #tpu.memory_space<vmem>>, vector<1x32xf32>
    %77 = vector.broadcast %76 : vector<1x32xf32> to vector<2x32xf32>
    %78 = arith.addf %75, %77 : vector<2x32xf32>
    %cst_39 = arith.constant 0.000000e+00 : f32
    %79 = vector.broadcast %cst_39 : f32 to vector<2x32xf32>
    %80 = arith.maximumf %78, %79 : vector<2x32xf32>
    %c0_40 = arith.constant 0 : index
    %c0_41 = arith.constant 0 : index
    %81 = vector.load %arg7[%c0_40, %c0_41] : memref<32x32xf32, #tpu.memory_space<vmem>>, vector<32x32xf32>
    %cst_42 = arith.constant dense<0.000000e+00> : vector<2x32xf32>
    %82 = tpu.matmul %80, %81, %cst_42 {dimension_numbers = #tpu.dot_dimension_numbers<[1], [0], [0], [1], [0, 0, 1, 1], [], []>} : vector<2x32xf32>, vector<32x32xf32>, vector<2x32xf32> -> vector<2x32xf32>
    %c0_43 = arith.constant 0 : index
    %c0_44 = arith.constant 0 : index
    %83 = vector.load %arg8[%c0_43, %c0_44] : memref<1x32xf32, #tpu.memory_space<vmem>>, vector<1x32xf32>
    %84 = vector.broadcast %83 : vector<1x32xf32> to vector<2x32xf32>
    %85 = arith.addf %82, %84 : vector<2x32xf32>
    %cst_45 = arith.constant 0.000000e+00 : f32
    %86 = vector.broadcast %cst_45 : f32 to vector<2x32xf32>
    %87 = arith.subf %86, %85 : vector<2x32xf32>
    %88 = math.exp %87 : vector<2x32xf32>
    %cst_46 = arith.constant 1.000000e+00 : f32
    %89 = vector.broadcast %cst_46 : f32 to vector<2x32xf32>
    %90 = arith.addf %89, %88 : vector<2x32xf32>
    %cst_47 = arith.constant 1.000000e+00 : f32
    %91 = vector.broadcast %cst_47 : f32 to vector<2x32xf32>
    %92 = arith.divf %91, %90 : vector<2x32xf32>
    %93 = arith.mulf %92, %80 : vector<2x32xf32>
    %94 = tpu.concatenate %61, %93 in 1 : vector<2x32xf32>, vector<2x32xf32> -> vector<2x64xf32>
    %c0_48 = arith.constant 0 : index
    %c0_49 = arith.constant 0 : index
    %95 = vector.load %arg9[%c0_48, %c0_49] : memref<2x64xf32, #tpu.memory_space<vmem>>, vector<2x64xf32>
    tpu.vector_store %arg9[%c0_48, %c0_49], %94 {strides = array<i32>} : memref<2x64xf32, #tpu.memory_space<vmem>>, vector<2x64xf32>,
    return
  }
  func.func @transform_0(%arg0: i32) -> (i32, i32, i32) {
    %c0_i32 = arith.constant 0 : i32
    %c0_i32_0 = arith.constant 0 : i32
    %c0_i32_1 = arith.constant 0 : i32
    return %arg0, %c0_i32, %c0_i32_0 : i32, i32, i32
  }
  func.func @transform_1(%arg0: i32) -> (i32, i32) {
    %c0_i32 = arith.constant 0 : i32
    %c0_i32_0 = arith.constant 0 : i32
    %c0_i32_1 = arith.constant 0 : i32
    return %c0_i32, %c0_i32_0 : i32, i32
  }
  func.func @transform_2(%arg0: i32) -> (i32, i32) {
    %c0_i32 = arith.constant 0 : i32
    %c0_i32_0 = arith.constant 0 : i32
    %c0_i32_1 = arith.constant 0 : i32
    return %c0_i32, %c0_i32_0 : i32, i32
  }
  func.func @transform_3(%arg0: i32) -> (i32, i32) {
    %c0_i32 = arith.constant 0 : i32
    %c0_i32_0 = arith.constant 0 : i32
    %c0_i32_1 = arith.constant 0 : i32
    return %c0_i32, %c0_i32_0 : i32, i32
  }
  func.func @transform_4(%arg0: i32) -> (i32, i32) {
    %c0_i32 = arith.constant 0 : i32
    %c0_i32_0 = arith.constant 0 : i32
    %c0_i32_1 = arith.constant 0 : i32
    return %c0_i32, %c0_i32_0 : i32, i32
  }
  func.func @transform_5(%arg0: i32) -> (i32, i32) {
    %c0_i32 = arith.constant 0 : i32
    %c0_i32_0 = arith.constant 0 : i32
    %c0_i32_1 = arith.constant 0 : i32
    return %c0_i32, %c0_i32_0 : i32, i32
  }
  func.func @transform_6(%arg0: i32) -> (i32, i32) {
    %c0_i32 = arith.constant 0 : i32
    %c0_i32_0 = arith.constant 0 : i32
    %c0_i32_1 = arith.constant 0 : i32
    return %c0_i32, %c0_i32_0 : i32, i32
  }
  func.func @transform_7(%arg0: i32) -> (i32, i32) {
    %c0_i32 = arith.constant 0 : i32
    %c0_i32_0 = arith.constant 0 : i32
    %c0_i32_1 = arith.constant 0 : i32
    return %c0_i32, %c0_i32_0 : i32, i32
  }
  func.func @transform_8(%arg0: i32) -> (i32, i32) {
    %c0_i32 = arith.constant 0 : i32
    %c0_i32_0 = arith.constant 0 : i32
    return %arg0, %c0_i32 : i32, i32
  }
}

</mosaic_0001>

<llo_original>
// kernel: tpu_custom_call.1
$region0: #{tpu_custom_call.1}
  #allocation0 [shape = 'u32[]', space=smem, size = 0x4, offset = 0x4, fixed_abs, tag = 'smem constant byte address 0x4 - core index']
  #allocation1 [shape = 'u32[144,128]{1,0:T(1,128)}', space=vmem, size = 0x12000, scoped, tag = 'internal scratch']
  %s0 = inlined_call_operand.vmem [shape: bf16[2,4,256], index: 0, kind: input, shape index: {}]
  %s1 = inlined_call_operand.vmem [shape: bf16[32,4], index: 1, kind: input, shape index: {}]
  %s2 = inlined_call_operand.vmem [shape: f32[32,1], index: 2, kind: input, shape index: {}]
  %s3 = inlined_call_operand.vmem [shape: f32[32,1], index: 3, kind: input, shape index: {}]
  %s4 = inlined_call_operand.vmem [shape: f32[16,32], index: 4, kind: input, shape index: {}]
  %s5 = inlined_call_operand.vmem [shape: f32[1,32], index: 5, kind: input, shape index: {}]
  %s6 = inlined_call_operand.vmem [shape: f32[32,32], index: 6, kind: input, shape index: {}]
  %s7 = inlined_call_operand.vmem [shape: f32[1,32], index: 7, kind: input, shape index: {}]
  %s8 = inlined_call_operand.hbm [shape: f32[2,64], index: 8, kind: output, shape index: {}]
  %s9 = sld [smem:[#allocation0]]
  $region42: #{tpu_custom_call.1} parent=0
    _
  %s11 = ssub.s32 1, %s9
  %s12 = scalar_select 0, %s11, %s9
  $region1: #{tpu_custom_call.1} parent=0
    #allocation2 [shape = 'u8[1024]{0}', space=vmem, size = 0x400, scoped, tag = 'output window, operand 0, single buffered']
    #allocation3 [shape = 's32[1]{0}', space=sflag, size = 0x4, scoped, tag = 'scoped memory for tpu_custom_call.1']
    %13 = vsyncpa [#allocation3], 0
    // Predicated region
    $region2: #{tpu_custom_call.1} parent=1 // pred_check
      _
    $region3: #{tpu_custom_call.1} parent=1 // pred_check_branch
      %15 = sbr.rel (0) target = $region5
    $region4: #{tpu_custom_call.1} parent=1 // pred_region
      _
    $region5: #{tpu_custom_call.1} parent=1 // pred_fallthru
      _
    // Predicated region
    $region6: #{tpu_custom_call.1} parent=1 // pred_check
      _
    $region7: #{tpu_custom_call.1} parent=1 // pred_check_branch
      %17 = sbr.rel (0) target = $region9
    $region8: #{tpu_custom_call.1} parent=1 // pred_region
      _
    $region9: #{tpu_custom_call.1} parent=1 // pred_fallthru
      _
    // Predicated region
    $region10: #{tpu_custom_call.1} parent=1 // pred_check
      _
    $region11: #{tpu_custom_call.1} parent=1 // pred_check_branch
      %19 = sbr.rel (0) target = $region13
    $region12: #{tpu_custom_call.1} parent=1 // pred_region
      _
    $region13: #{tpu_custom_call.1} parent=1 // pred_fallthru
      _
    // Predicated region
    $region14: #{tpu_custom_call.1} parent=1 // pred_check
      _
    $region15: #{tpu_custom_call.1} parent=1 // pred_check_branch
      %21 = sbr.rel (0) target = $region17
    $region16: #{tpu_custom_call.1} parent=1 // pred_region
      _
    $region17: #{tpu_custom_call.1} parent=1 // pred_fallthru
      _
    // Predicated region
    $region18: #{tpu_custom_call.1} parent=1 // pred_check
      _
    $region19: #{tpu_custom_call.1} parent=1 // pred_check_branch
      %23 = sbr.rel (0) target = $region21
    $region20: #{tpu_custom_call.1} parent=1 // pred_region
      _
    $region21: #{tpu_custom_call.1} parent=1 // pred_fallthru
      _
    // Predicated region
    $region22: #{tpu_custom_call.1} parent=1 // pred_check
      _
    $region23: #{tpu_custom_call.1} parent=1 // pred_check_branch
      %25 = sbr.rel (0) target = $region25
    $region24: #{tpu_custom_call.1} parent=1 // pred_region
      _
    $region25: #{tpu_custom_call.1} parent=1 // pred_fallthru
      _
    // Predicated region
    $region26: #{tpu_custom_call.1} parent=1 // pred_check
      _
    $region27: #{tpu_custom_call.1} parent=1 // pred_check_branch
      %27 = sbr.rel (0) target = $region29
    $region28: #{tpu_custom_call.1} parent=1 // pred_region
      _
    $region29: #{tpu_custom_call.1} parent=1 // pred_fallthru
      _
    // Predicated region
    $region30: #{tpu_custom_call.1} parent=1 // pred_check
      _
    $region31: #{tpu_custom_call.1} parent=1 // pred_check_branch
      %29 = sbr.rel (0) target = $region33
    $region32: #{tpu_custom_call.1} parent=1 // pred_region
      _
    $region33: #{tpu_custom_call.1} parent=1 // pred_fallthru
      _
    %v31 = vld [vmem:[%s0] sm:$0xf]
    %v32 = vld [vmem:[%s0 + $0x4] sm:$0xf]
    %v33 = vld [vmem:[%s1] sm:$0xf]
    %v34 = vld [vmem:[%s1 + $0x4] sm:$0xf]
    %v35 = vld [vmem:[%s1 + $0x8] sm:$0xf]
    %v36 = vld [vmem:[%s1 + $0xc] sm:$0xf]
    %v41 = vunpack.c.l.b16 %v33
    %v42 = vunpack.c.l.b16 %v34
    %v43 = vunpack.c.l.b16 %v35
    %v44 = vunpack.c.l.b16 %v36
    %v45 = vpack.c.b16 %v42, %v41
    %v46 = vpack.c.b16 %v44, %v43
    %v49 = vunpack.c.l.s4 1983009808
    %v50 = vunpack.c.0.s8 %v49
    %v51 = vlaneseq
    %v52 = vshrl.u32 %v51, 7
    %v53 = vsub.s32 %v50, %v52
    %v54 = vrot.slane %v31, %v53
    %v55 = vcombine.high %v54, %v54
    %vm56 = vcmask 31744
    %v58 = vsel %vm56, %v45, 0
    %v61 = vsel %vm56, %v46, 0
    %vm63 = vcmask 1041408
    %v65 = vsel %vm63, %v54, 0
    %v68 = vsel %vm63, %v55, 0
    %70 = vmatprep.subr.bf16.mxu0 0
    %71 = vmatpush1.bf16.msra.mxu0 0
    %72 = vmatprep.subr.bf16.mxu0 0
    %73 = vmatpush1.bf16.msra.mxu0 0
    %74 = vmatprep.subr.bf16.mxu0 0
    %75 = vmatpush1.bf16.msra.mxu0 0
    %76 = vmatprep.subr.bf16.mxu0 0
    %77 = vmatpush1.bf16.msra.mxu0 0
    %78 = vmatprep.subr.bf16.mxu0 0
    %79 = vmatpush1.bf16.msra.mxu0 0
    %80 = vmatprep.subr.bf16.mxu0 0
    %81 = vmatpush1.bf16.msra.mxu0 0
    %82 = vmatprep.subr.bf16.mxu0 0
    %83 = vmatpush1.bf16.msra.mxu0 0
    %84 = vmatprep.subr.bf16.mxu0 %v68
    %85 = vmatpush1.bf16.msra.mxu0 %v65
    %86 = vmatprep.subr.bf16.mxu0 0
    %87 = vmatpush2.bf16.msra.mxu0 0
    %88 = vmatprep.subr.bf16.mxu0 0
    %89 = vmatpush2.bf16.msra.mxu0 0
    %90 = vmatprep.subr.bf16.mxu0 0
    %91 = vmatpush2.bf16.msra.mxu0 0
    %92 = vmatprep.subr.bf16.mxu0 0
    %93 = vmatpush2.bf16.msra.mxu0 0
    %94 = vmatprep.subr.bf16.mxu0 0
    %95 = vmatpush2.bf16.msra.mxu0 0
    %96 = vmatprep.subr.bf16.mxu0 0
    %97 = vmatpush2.bf16.msra.mxu0 0
    %98 = vmatprep.subr.bf16.mxu0 0
    %99 = vmatpush2.bf16.msra.mxu0 0
    %100 = vmatprep.subr.bf16.mxu0 0
    %101 = vmatpush2.bf16.msra.mxu0 0
    %102 = vmatprep.mubr.bf16.mxu0 0
    %103 = vmatmul.mubr.bf16.gmra.mxu0 %v58
    %v104 = vpop.f32.mrf.mxu0
    %v105 = vadd.f32 0.0, %v104
    %v106 = vpop.f32.mrf.mxu0
    %v107 = vadd.f32 0.0, %v106
    %v108 = vpop.f32.mrf.mxu0
    %v109 = vadd.f32 0.0, %v108
    %v110 = vpop.f32.mrf.mxu0
    %v111 = vadd.f32 0.0, %v110
    %112 = vmatprep.mubr.bf16.mxu0 0
    %113 = vmatmul.mubr.bf16.gmra.mxu0 %v61
    %v114 = vpop.f32.mrf.mxu0
    %v115 = vadd.f32 0.0, %v114
    %v116 = vpop.f32.mrf.mxu0
    %v117 = vadd.f32 0.0, %v116
    %v118 = vpop.f32.mrf.mxu0
    %v119 = vadd.f32 0.0, %v118
    %v120 = vpop.f32.mrf.mxu0
    %v121 = vadd.f32 0.0, %v120
    %122 = vdwg.mxu0
    %v125 = vunpack.c.l.s4 1983009808
    %v126 = vunpack.c.0.s8 %v125
    %v127 = vlaneseq
    %v128 = vshrl.u32 %v127, 7
    %v129 = vsub.s32 %v126, %v128
    %v130 = vrot.slane %v32, %v129
    %v131 = vcombine.high %v130, %v130
    %v133 = vsel %vm63, %v130, 0
    %v136 = vsel %vm63, %v131, 0
    %138 = vmatprep.subr.bf16.mxu0 0
    %139 = vmatpush1.bf16.msra.mxu0 0
    %140 = vmatprep.subr.bf16.mxu0 0
    %141 = vmatpush1.bf16.msra.mxu0 0
    %142 = vmatprep.subr.bf16.mxu0 0
    %143 = vmatpush1.bf16.msra.mxu0 0
    %144 = vmatprep.subr.bf16.mxu0 0
    %145 = vmatpush1.bf16.msra.mxu0 0
    %146 = vmatprep.subr.bf16.mxu0 0
    %147 = vmatpush1.bf16.msra.mxu0 0
    %148 = vmatprep.subr.bf16.mxu0 0
    %149 = vmatpush1.bf16.msra.mxu0 0
    %150 = vmatprep.subr.bf16.mxu0 0
    %151 = vmatpush1.bf16.msra.mxu0 0
    %152 = vmatprep.subr.bf16.mxu0 %v136
    %153 = vmatpush1.bf16.msra.mxu0 %v133
    %154 = vmatprep.subr.bf16.mxu0 0
    %155 = vmatpush2.bf16.msra.mxu0 0
    %156 = vmatprep.subr.bf16.mxu0 0
    %157 = vmatpush2.bf16.msra.mxu0 0
    %158 = vmatprep.subr.bf16.mxu0 0
    %159 = vmatpush2.bf16.msra.mxu0 0
    %160 = vmatprep.subr.bf16.mxu0 0
    %161 = vmatpush2.bf16.msra.mxu0 0
    %162 = vmatprep.subr.bf16.mxu0 0
    %163 = vmatpush2.bf16.msra.mxu0 0
    %164 = vmatprep.subr.bf16.mxu0 0
    %165 = vmatpush2.bf16.msra.mxu0 0
    %166 = vmatprep.subr.bf16.mxu0 0
    %167 = vmatpush2.bf16.msra.mxu0 0
    %168 = vmatprep.subr.bf16.mxu0 0
    %169 = vmatpush2.bf16.msra.mxu0 0
    %170 = vmatprep.mubr.bf16.mxu0 0
    %171 = vmatmul.mubr.bf16.gmra.mxu0 %v58
    %v172 = vpop.f32.mrf.mxu0
    %v173 = vadd.f32 0.0, %v172
    %v174 = vpop.f32.mrf.mxu0
    %v175 = vadd.f32 0.0, %v174
    %v176 = vpop.f32.mrf.mxu0
    %v177 = vadd.f32 0.0, %v176
    %v178 = vpop.f32.mrf.mxu0
    %v179 = vadd.f32 0.0, %v178
    %180 = vmatprep.mubr.bf16.mxu0 0
    %181 = vmatmul.mubr.bf16.gmra.mxu0 %v61
    %v182 = vpop.f32.mrf.mxu0
    %v183 = vadd.f32 0.0, %v182
    %v184 = vpop.f32.mrf.mxu0
    %v185 = vadd.f32 0.0, %v184
    %v186 = vpop.f32.mrf.mxu0
    %v187 = vadd.f32 0.0, %v186
    %v188 = vpop.f32.mrf.mxu0
    %v189 = vadd.f32 0.0, %v188
    %190 = vdwg.mxu0
    %v191 = vadd.f32 %v105, %v107
    %192 = vadd.xlane.f32.xlu0 %v191
    %v193 = vpop.xlane.xlu0 %192
    %v194 = vadd.f32 %v109, %v111
    %195 = vadd.xlane.f32.xlu0 %v194
    %v196 = vpop.xlane.xlu0 %195
    %v197 = vadd.f32 %v115, %v117
    %198 = vadd.xlane.f32.xlu0 %v197
    %v199 = vpop.xlane.xlu0 %198
    %v200 = vadd.f32 %v119, %v121
    %201 = vadd.xlane.f32.xlu0 %v200
    %v202 = vpop.xlane.xlu0 %201
    %v203 = vadd.f32 %v173, %v175
    %204 = vadd.xlane.f32.xlu0 %v203
    %v205 = vpop.xlane.xlu0 %204
    %v206 = vadd.f32 %v177, %v179
    %207 = vadd.xlane.f32.xlu0 %v206
    %v208 = vpop.xlane.xlu0 %207
    %v209 = vadd.f32 %v183, %v185
    %210 = vadd.xlane.f32.xlu0 %v209
    %v211 = vpop.xlane.xlu0 %210
    %v212 = vadd.f32 %v187, %v189
    %213 = vadd.xlane.f32.xlu0 %v212
    %v214 = vpop.xlane.xlu0 %213
    %v215 = vmul.f32 %v105, %v105
    %v216 = vmul.f32 %v107, %v107
    %v217 = vmul.f32 %v109, %v109
    %v218 = vmul.f32 %v111, %v111
    %v219 = vmul.f32 %v115, %v115
    %v220 = vmul.f32 %v117, %v117
    %v221 = vmul.f32 %v119, %v119
    %v222 = vmul.f32 %v121, %v121
    %v223 = vmul.f32 %v173, %v173
    %v224 = vmul.f32 %v175, %v175
    %v225 = vmul.f32 %v177, %v177
    %v226 = vmul.f32 %v179, %v179
    %v227 = vmul.f32 %v183, %v183
    %v228 = vmul.f32 %v185, %v185
    %v229 = vmul.f32 %v187, %v187
    %v230 = vmul.f32 %v189, %v189
    %v231 = vadd.f32 %v215, %v216
    %232 = vadd.xlane.f32.xlu0 %v231
    %v233 = vpop.xlane.xlu0 %232
    %v234 = vadd.f32 %v217, %v218
    %235 = vadd.xlane.f32.xlu0 %v234
    %v236 = vpop.xlane.xlu0 %235
    %v237 = vadd.f32 %v219, %v220
    %238 = vadd.xlane.f32.xlu0 %v237
    %v239 = vpop.xlane.xlu0 %238
    %v240 = vadd.f32 %v221, %v222
    %241 = vadd.xlane.f32.xlu0 %v240
    %v242 = vpop.xlane.xlu0 %241
    %v243 = vadd.f32 %v223, %v224
    %244 = vadd.xlane.f32.xlu0 %v243
    %v245 = vpop.xlane.xlu0 %244
    %v246 = vadd.f32 %v225, %v226
    %247 = vadd.xlane.f32.xlu0 %v246
    %v248 = vpop.xlane.xlu0 %247
    %v249 = vadd.f32 %v227, %v228
    %250 = vadd.xlane.f32.xlu0 %v249
    %v251 = vpop.xlane.xlu0 %250
    %v252 = vadd.f32 %v229, %v230
    %253 = vadd.xlane.f32.xlu0 %v252
    %v254 = vpop.xlane.xlu0 %253
    %v255 = vmul.f32 %v193, 0.00390625
    %v256 = vmul.f32 %v196, 0.00390625
    %v257 = vmul.f32 %v199, 0.00390625
    %v258 = vmul.f32 %v202, 0.00390625
    %v259 = vmul.f32 %v205, 0.00390625
    %v260 = vmul.f32 %v208, 0.00390625
    %v261 = vmul.f32 %v211, 0.00390625
    %v262 = vmul.f32 %v214, 0.00390625
    %v263 = vmul.f32 %v233, 0.00390625
    %v264 = vmul.f32 %v236, 0.00390625
    %v265 = vmul.f32 %v239, 0.00390625
    %v266 = vmul.f32 %v242, 0.00390625
    %v267 = vmul.f32 %v245, 0.00390625
    %v268 = vmul.f32 %v248, 0.00390625
    %v269 = vmul.f32 %v251, 0.00390625
    %v270 = vmul.f32 %v254, 0.00390625
    %v271 = vmul.f32 %v255, %v255
    %v272 = vmul.f32 %v256, %v256
    %v273 = vmul.f32 %v257, %v257
    %v274 = vmul.f32 %v258, %v258
    %v275 = vmul.f32 %v259, %v259
    %v276 = vmul.f32 %v260, %v260
    %v277 = vmul.f32 %v261, %v261
    %v278 = vmul.f32 %v262, %v262
    %v279 = vsub.f32 %v263, %v271
    %v280 = vsub.f32 %v264, %v272
    %v281 = vsub.f32 %v265, %v273
    %v282 = vsub.f32 %v266, %v274
    %v283 = vsub.f32 %v267, %v275
    %v284 = vsub.f32 %v268, %v276
    %v285 = vsub.f32 %v269, %v277
    %v286 = vsub.f32 %v270, %v278
    %v287 = vmax.f32 %v279, 0.0
    %v288 = vmax.f32 %v280, 0.0
    %v289 = vmax.f32 %v281, 0.0
    %v290 = vmax.f32 %v282, 0.0
    %v291 = vmax.f32 %v283, 0.0
    %v292 = vmax.f32 %v284, 0.0
    %v293 = vmax.f32 %v285, 0.0
    %v294 = vmax.f32 %v286, 0.0
    %v295 = vld [vmem:[%s2] sm:$0xff]
    %v296 = vld [vmem:[%s2 + $0x8] sm:$0xff]
    %v297 = vld [vmem:[%s2 + $0x10] sm:$0xff]
    %v298 = vld [vmem:[%s2 + $0x18] sm:$0xff]
    %v299 = vadd.f32 %v287, 1e-05
    %v300 = vadd.f32 %v288, 1e-05
    %v301 = vadd.f32 %v289, 1e-05
    %v302 = vadd.f32 %v290, 1e-05
    %v303 = vadd.f32 %v291, 1e-05
    %v304 = vadd.f32 %v292, 1e-05
    %v305 = vadd.f32 %v293, 1e-05
    %v306 = vadd.f32 %v294, 1e-05
    %v307 = vrsqrt.pop %v299
    %v308 = vrsqrt.pop %v300
    %v309 = vrsqrt.pop %v301
    %v310 = vrsqrt.pop %v302
    %v311 = vrsqrt.pop %v303
    %v312 = vrsqrt.pop %v304
    %v313 = vrsqrt.pop %v305
    %v314 = vrsqrt.pop %v306
    %v315 = vmul.f32 %v295, %v307
    %v316 = vmul.f32 %v296, %v308
    %v317 = vmul.f32 %v297, %v309
    %v318 = vmul.f32 %v298, %v310
    %v319 = vmul.f32 %v295, %v311
    %v320 = vmul.f32 %v296, %v312
    %v321 = vmul.f32 %v297, %v313
    %v322 = vmul.f32 %v298, %v314
    %v323 = vld [vmem:[%s3] sm:$0xff]
    %v324 = vld [vmem:[%s3 + $0x8] sm:$0xff]
    %v325 = vld [vmem:[%s3 + $0x10] sm:$0xff]
    %v326 = vld [vmem:[%s3 + $0x18] sm:$0xff]
    %v327 = vmul.f32 %v255, %v315
    %v328 = vmul.f32 %v256, %v316
    %v329 = vmul.f32 %v257, %v317
    %v330 = vmul.f32 %v258, %v318
    %v331 = vmul.f32 %v259, %v319
    %v332 = vmul.f32 %v260, %v320
    %v333 = vmul.f32 %v261, %v321
    %v334 = vmul.f32 %v262, %v322
    %v335 = vsub.f32 %v323, %v327
    %v336 = vsub.f32 %v324, %v328
    %v337 = vsub.f32 %v325, %v329
    %v338 = vsub.f32 %v326, %v330
    %v339 = vsub.f32 %v323, %v331
    %v340 = vsub.f32 %v324, %v332
    %v341 = vsub.f32 %v325, %v333
    %v342 = vsub.f32 %v326, %v334
    %344 = vset.pattern.permute.xlu0 0
    %345 = vperm.xlu0 %344, %v315
    %v346 = vpop.permute.xlu0 %345
    %349 = vset.pattern.permute.xlu0 0
    %350 = vperm.xlu0 %349, %v316
    %v351 = vpop.permute.xlu0 %350
    %354 = vset.pattern.permute.xlu0 0
    %355 = vperm.xlu0 %354, %v319
    %v356 = vpop.permute.xlu0 %355
    %359 = vset.pattern.permute.xlu0 0
    %360 = vperm.xlu0 %359, %v320
    %v361 = vpop.permute.xlu0 %360
    %v363 = vmul.f32 %v105, %v346
    %v364 = vmul.f32 %v107, %v346
    %v365 = vmul.f32 %v109, %v351
    %v366 = vmul.f32 %v111, %v351
    %v367 = vmul.f32 %v173, %v356
    %v368 = vmul.f32 %v175, %v356
    %v369 = vmul.f32 %v177, %v361
    %v370 = vmul.f32 %v179, %v361
    %372 = vset.pattern.permute.xlu0 0
    %373 = vperm.xlu0 %372, %v335
    %v374 = vpop.permute.xlu0 %373
    %377 = vset.pattern.permute.xlu0 0
    %378 = vperm.xlu0 %377, %v336
    %v379 = vpop.permute.xlu0 %378
    %382 = vset.pattern.permute.xlu0 0
    %383 = vperm.xlu0 %382, %v339
    %v384 = vpop.permute.xlu0 %383
    %387 = vset.pattern.permute.xlu0 0
    %388 = vperm.xlu0 %387, %v340
    %v389 = vpop.permute.xlu0 %388
    %v391 = vadd.f32 %v363, %v374
    %v392 = vadd.f32 %v364, %v374
    %v393 = vadd.f32 %v365, %v379
    %v394 = vadd.f32 %v366, %v379
    %v395 = vadd.f32 %v367, %v384
    %v396 = vadd.f32 %v368, %v384
    %v397 = vadd.f32 %v369, %v389
    %v398 = vadd.f32 %v370, %v389
    %v399 = vmax.f32 %v391, 0.0
    %v400 = vmax.f32 %v392, 0.0
    %v401 = vmax.f32 %v393, 0.0
    %v402 = vmax.f32 %v394, 0.0
    %v403 = vmax.f32 %v395, 0.0
    %v404 = vmax.f32 %v396, 0.0
    %v405 = vmax.f32 %v397, 0.0
    %v406 = vmax.f32 %v398, 0.0
    %v407 = vadd.f32 %v399, %v400
    %408 = vadd.xlane.f32.xlu0 %v407
    %v409 = vpop.xlane.xlu0 %408
    %v410 = vadd.f32 %v401, %v402
    %411 = vadd.xlane.f32.xlu0 %v410
    %v412 = vpop.xlane.xlu0 %411
    %v413 = vadd.f32 %v403, %v404
    %414 = vadd.xlane.f32.xlu0 %v413
    %v415 = vpop.xlane.xlu0 %414
    %v416 = vadd.f32 %v405, %v406
    %417 = vadd.xlane.f32.xlu0 %v416
    %v418 = vpop.xlane.xlu0 %417
    %v419 = vmul.f32 %v409, 0.00390625
    %v420 = vmul.f32 %v412, 0.00390625
    %v421 = vmul.f32 %v415, 0.00390625
    %v422 = vmul.f32 %v418, 0.00390625
    %v423 = vld [vmem:[%s4] sm:$0xff]
    %v424 = vld [vmem:[%s4 + $0x8] sm:$0xff]
    %v425 = vld [vmem:[%s5] sm:$0x1]
    %v427 = vlaneseq
    %v428 = vshrl.u32 %v427, 7
    %v429 = vsub.s32 0, %v428
    %v430 = vrot.slane %v425, %v429
    %v436 = vlaneseq
    %v437 = vand.u32 %v436, 127
    %v438 = vlaneseq
    %v439 = vshrl.u32 %v438, 7
    %v440 = vsub.s32 %v437, %v439
    %v441 = vrot.slane %v419, %v440
    %v442 = vadd.s32 %v437, 4294967288
    %v443 = vlaneseq
    %v444 = vshrl.u32 %v443, 7
    %v445 = vsub.s32 %v442, %v444
    %v446 = vrot.slane %v420, %v445
    %vm447 = vcmask 130112
    %v448 = vsel %vm447, %v446, %v441
    %v449 = vlaneseq
    %v450 = vshrl.u32 %v449, 7
    %v451 = vsub.s32 %v437, %v450
    %v452 = vrot.slane %v421, %v451
    %v453 = vlaneseq
    %v454 = vshrl.u32 %v453, 7
    %v455 = vsub.s32 %v442, %v454
    %v456 = vrot.slane %v422, %v455
    %v457 = vsel %vm447, %v456, %v452
    %vm458 = vcmask 1041409
    %v459 = vsel %vm458, %v457, %v448
    %vm460 = vcmask 130048
    %v461 = vsel %vm460, %v459, 0
    %463 = vmatprep.subr.mxu0 0.0
    %464 = vmatpush1.msra.mxu0 0.0
    %465 = vmatprep.subr.mxu0 0.0
    %466 = vmatpush1.msra.mxu0 0.0
    %467 = vmatprep.subr.mxu0 0.0
    %468 = vmatpush1.msra.mxu0 0.0
    %469 = vmatprep.subr.mxu0 0.0
    %470 = vmatpush1.msra.mxu0 0.0
    %471 = vmatprep.subr.mxu0 0.0
    %472 = vmatpush1.msra.mxu0 0.0
    %473 = vmatprep.subr.mxu0 0.0
    %474 = vmatpush1.msra.mxu0 0.0
    %475 = vmatprep.subr.mxu0 0.0
    %476 = vmatpush1.msra.mxu0 0.0
    %477 = vmatprep.subr.mxu0 0.0
    %478 = vmatpush1.msra.mxu0 0.0
    %479 = vmatprep.subr.mxu0 0.0
    %480 = vmatpush1.msra.mxu0 0.0
    %481 = vmatprep.subr.mxu0 0.0
    %482 = vmatpush1.msra.mxu0 0.0
    %483 = vmatprep.subr.mxu0 0.0
    %484 = vmatpush1.msra.mxu0 0.0
    %485 = vmatprep.subr.mxu0 0.0
    %486 = vmatpush1.msra.mxu0 0.0
    %487 = vmatprep.subr.mxu0 0.0
    %488 = vmatpush1.msra.mxu0 0.0
    %489 = vmatprep.subr.mxu0 0.0
    %490 = vmatpush1.msra.mxu0 0.0
    %491 = vmatprep.subr.mxu0 0.0
    %492 = vmatpush1.msra.mxu0 %v424
    %493 = vmatprep.subr.mxu0 0.0
    %494 = vmatpush1.msra.mxu0 %v423
    %495 = vmatprep.subr.mxu0 0.0
    %496 = vmatpush2.msra.mxu0 0.0
    %497 = vmatprep.subr.mxu0 0.0
    %498 = vmatpush2.msra.mxu0 0.0
    %499 = vmatprep.subr.mxu0 0.0
    %500 = vmatpush2.msra.mxu0 0.0
    %501 = vmatprep.subr.mxu0 0.0
    %502 = vmatpush2.msra.mxu0 0.0
    %503 = vmatprep.subr.mxu0 0.0
    %504 = vmatpush2.msra.mxu0 0.0
    %505 = vmatprep.subr.mxu0 0.0
    %506 = vmatpush2.msra.mxu0 0.0
    %507 = vmatprep.subr.mxu0 0.0
    %508 = vmatpush2.msra.mxu0 0.0
    %509 = vmatprep.subr.mxu0 0.0
    %510 = vmatpush2.msra.mxu0 0.0
    %511 = vmatprep.subr.mxu0 0.0
    %512 = vmatpush2.msra.mxu0 0.0
    %513 = vmatprep.subr.mxu0 0.0
    %514 = vmatpush2.msra.mxu0 0.0
    %515 = vmatprep.subr.mxu0 0.0
    %516 = vmatpush2.msra.mxu0 0.0
    %517 = vmatprep.subr.mxu0 0.0
    %518 = vmatpush2.msra.mxu0 0.0
    %519 = vmatprep.subr.mxu0 0.0
    %520 = vmatpush2.msra.mxu0 0.0
    %521 = vmatprep.subr.mxu0 0.0
    %522 = vmatpush2.msra.mxu0 0.0
    %523 = vmatprep.subr.mxu0 0.0
    %524 = vmatpush2.msra.mxu0 0.0
    %525 = vmatprep.subr.mxu0 0.0
    %526 = vmatpush2.msra.mxu0 0.0
    %527 = vmatprep.mubr.f32.mxu0 0.0
    %528 = vmatmul.mubr.f32.gmra.mxu0 %v461
    %v529 = vpop.f32.mrf.mxu0
    %v530 = vadd.f32 %v430, %v529
    %v531 = vpop.f32.mrf.mxu0
    %532 = vdwg.mxu0
    %v533 = vmax.f32 %v530, 0.0
    %v534 = vld [vmem:[%s6] sm:$0xff]
    %v535 = vld [vmem:[%s6 + $0x8] sm:$0xff]
    %v536 = vld [vmem:[%s6 + $0x10] sm:$0xff]
    %v537 = vld [vmem:[%s6 + $0x18] sm:$0xff]
    %v538 = vld [vmem:[%s7] sm:$0x1]
    %v540 = vlaneseq
    %v541 = vshrl.u32 %v540, 7
    %v542 = vsub.s32 0, %v541
    %v543 = vrot.slane %v538, %v542
    %vm545 = vcmask 261120
    %v547 = vsel %vm545, %v533, 0
    %549 = vmatprep.subr.mxu0 0.0
    %550 = vmatpush1.msra.mxu0 0.0
    %551 = vmatprep.subr.mxu0 0.0
    %552 = vmatpush1.msra.mxu0 0.0
    %553 = vmatprep.subr.mxu0 0.0
    %554 = vmatpush1.msra.mxu0 0.0
    %555 = vmatprep.subr.mxu0 0.0
    %556 = vmatpush1.msra.mxu0 0.0
    %557 = vmatprep.subr.mxu0 0.0
    %558 = vmatpush1.msra.mxu0 0.0
    %559 = vmatprep.subr.mxu0 0.0
    %560 = vmatpush1.msra.mxu0 0.0
    %561 = vmatprep.subr.mxu0 0.0
    %562 = vmatpush1.msra.mxu0 0.0
    %563 = vmatprep.subr.mxu0 0.0
    %564 = vmatpush1.msra.mxu0 0.0
    %565 = vmatprep.subr.mxu0 0.0
    %566 = vmatpush1.msra.mxu0 0.0
    %567 = vmatprep.subr.mxu0 0.0
    %568 = vmatpush1.msra.mxu0 0.0
    %569 = vmatprep.subr.mxu0 0.0
    %570 = vmatpush1.msra.mxu0 0.0
    %571 = vmatprep.subr.mxu0 0.0
    %572 = vmatpush1.msra.mxu0 0.0
    %573 = vmatprep.subr.mxu0 0.0
    %574 = vmatpush1.msra.mxu0 %v537
    %575 = vmatprep.subr.mxu0 0.0
    %576 = vmatpush1.msra.mxu0 %v536
    %577 = vmatprep.subr.mxu0 0.0
    %578 = vmatpush1.msra.mxu0 %v535
    %579 = vmatprep.subr.mxu0 0.0
    %580 = vmatpush1.msra.mxu0 %v534
    %581 = vmatprep.subr.mxu0 0.0
    %582 = vmatpush2.msra.mxu0 0.0
    %583 = vmatprep.subr.mxu0 0.0
    %584 = vmatpush2.msra.mxu0 0.0
    %585 = vmatprep.subr.mxu0 0.0
    %586 = vmatpush2.msra.mxu0 0.0
    %587 = vmatprep.subr.mxu0 0.0
    %588 = vmatpush2.msra.mxu0 0.0
    %589 = vmatprep.subr.mxu0 0.0
    %590 = vmatpush2.msra.mxu0 0.0
    %591 = vmatprep.subr.mxu0 0.0
    %592 = vmatpush2.msra.mxu0 0.0
    %593 = vmatprep.subr.mxu0 0.0
    %594 = vmatpush2.msra.mxu0 0.0
    %595 = vmatprep.subr.mxu0 0.0
    %596 = vmatpush2.msra.mxu0 0.0
    %597 = vmatprep.subr.mxu0 0.0
    %598 = vmatpush2.msra.mxu0 0.0
    %599 = vmatprep.subr.mxu0 0.0
    %600 = vmatpush2.msra.mxu0 0.0
    %601 = vmatprep.subr.mxu0 0.0
    %602 = vmatpush2.msra.mxu0 0.0
    %603 = vmatprep.subr.mxu0 0.0
    %604 = vmatpush2.msra.mxu0 0.0
    %605 = vmatprep.subr.mxu0 0.0
    %606 = vmatpush2.msra.mxu0 0.0
    %607 = vmatprep.subr.mxu0 0.0
    %608 = vmatpush2.msra.mxu0 0.0
    %609 = vmatprep.subr.mxu0 0.0
    %610 = vmatpush2.msra.mxu0 0.0
    %611 = vmatprep.subr.mxu0 0.0
    %612 = vmatpush2.msra.mxu0 0.0
    %613 = vmatprep.mubr.f32.mxu0 0.0
    %614 = vmatmul.mubr.f32.gmra.mxu0 %v547
    %v615 = vpop.f32.mrf.mxu0
    %v616 = vadd.f32 %v543, %v615
    %v617 = vpop.f32.mrf.mxu0
    %618 = vdwg.mxu0
    %v619 = vsub.f32 0.0, %v616
    %v620 = vmul.f32 %v619, 1.442695
    %v621 = vpow.pop %v620
    %v622 = vadd.f32 %v621, 1.0
    %v623 = vrcp.pop %v622
    %v624 = vmul.f32 1.0, %v623
    %v625 = vmul.f32 %v624, %v533
    %627 = vset.pattern.permute.xlu0 0
    %628 = vperm.xlu0 %627, %v317
    %v629 = vpop.permute.xlu0 %628
    %632 = vset.pattern.permute.xlu0 0
    %633 = vperm.xlu0 %632, %v318
    %v634 = vpop.permute.xlu0 %633
    %637 = vset.pattern.permute.xlu0 0
    %638 = vperm.xlu0 %637, %v321
    %v639 = vpop.permute.xlu0 %638
    %642 = vset.pattern.permute.xlu0 0
    %643 = vperm.xlu0 %642, %v322
    %v644 = vpop.permute.xlu0 %643
    %v646 = vmul.f32 %v115, %v629
    %v647 = vmul.f32 %v117, %v629
    %v648 = vmul.f32 %v119, %v634
    %v649 = vmul.f32 %v121, %v634
    %v650 = vmul.f32 %v183, %v639
    %v651 = vmul.f32 %v185, %v639
    %v652 = vmul.f32 %v187, %v644
    %v653 = vmul.f32 %v189, %v644
    %655 = vset.pattern.permute.xlu0 0
    %656 = vperm.xlu0 %655, %v337
    %v657 = vpop.permute.xlu0 %656
    %660 = vset.pattern.permute.xlu0 0
    %661 = vperm.xlu0 %660, %v338
    %v662 = vpop.permute.xlu0 %661
    %665 = vset.pattern.permute.xlu0 0
    %666 = vperm.xlu0 %665, %v341
    %v667 = vpop.permute.xlu0 %666
    %670 = vset.pattern.permute.xlu0 0
    %671 = vperm.xlu0 %670, %v342
    %v672 = vpop.permute.xlu0 %671
    %v674 = vadd.f32 %v646, %v657
    %v675 = vadd.f32 %v647, %v657
    %v676 = vadd.f32 %v648, %v662
    %v677 = vadd.f32 %v649, %v662
    %v678 = vadd.f32 %v650, %v667
    %v679 = vadd.f32 %v651, %v667
    %v680 = vadd.f32 %v652, %v672
    %v681 = vadd.f32 %v653, %v672
    %v682 = vmax.f32 %v674, 0.0
    %v683 = vmax.f32 %v675, 0.0
    %v684 = vmax.f32 %v676, 0.0
    %v685 = vmax.f32 %v677, 0.0
    %v686 = vmax.f32 %v678, 0.0
    %v687 = vmax.f32 %v679, 0.0
    %v688 = vmax.f32 %v680, 0.0
    %v689 = vmax.f32 %v681, 0.0
    %v690 = vadd.f32 %v682, %v683
    %691 = vadd.xlane.f32.xlu0 %v690
    %v692 = vpop.xlane.xlu0 %691
    %v693 = vadd.f32 %v684, %v685
    %694 = vadd.xlane.f32.xlu0 %v693
    %v695 = vpop.xlane.xlu0 %694
    %v696 = vadd.f32 %v686, %v687
    %697 = vadd.xlane.f32.xlu0 %v696
    %v698 = vpop.xlane.xlu0 %697
    %v699 = vadd.f32 %v688, %v689
    %700 = vadd.xlane.f32.xlu0 %v699
    %v701 = vpop.xlane.xlu0 %700
    %v702 = vmul.f32 %v692, 0.00390625
    %v703 = vmul.f32 %v695, 0.00390625
    %v704 = vmul.f32 %v698, 0.00390625
    %v705 = vmul.f32 %v701, 0.00390625
    %v710 = vlaneseq
    %v711 = vshrl.u32 %v710, 7
    %v712 = vsub.s32 %v437, %v711
    %v713 = vrot.slane %v702, %v712
    %v714 = vlaneseq
    %v715 = vshrl.u32 %v714, 7
    %v716 = vsub.s32 %v442, %v715
    %v717 = vrot.slane %v703, %v716
    %v718 = vsel %vm447, %v717, %v713
    %v719 = vlaneseq
    %v720 = vshrl.u32 %v719, 7
    %v721 = vsub.s32 %v437, %v720
    %v722 = vrot.slane %v704, %v721
    %v723 = vlaneseq
    %v724 = vshrl.u32 %v723, 7
    %v725 = vsub.s32 %v442, %v724
    %v726 = vrot.slane %v705, %v725
    %v727 = vsel %vm447, %v726, %v722
    %v728 = vsel %vm458, %v727, %v718
    %v729 = vsel %vm460, %v728, 0
    %731 = vmatprep.subr.mxu0 0.0
    %732 = vmatpush1.msra.mxu0 0.0
    %733 = vmatprep.subr.mxu0 0.0
    %734 = vmatpush1.msra.mxu0 0.0
    %735 = vmatprep.subr.mxu0 0.0
    %736 = vmatpush1.msra.mxu0 0.0
    %737 = vmatprep.subr.mxu0 0.0
    %738 = vmatpush1.msra.mxu0 0.0
    %739 = vmatprep.subr.mxu0 0.0
    %740 = vmatpush1.msra.mxu0 0.0
    %741 = vmatprep.subr.mxu0 0.0
    %742 = vmatpush1.msra.mxu0 0.0
    %743 = vmatprep.subr.mxu0 0.0
    %744 = vmatpush1.msra.mxu0 0.0
    %745 = vmatprep.subr.mxu0 0.0
    %746 = vmatpush1.msra.mxu0 0.0
    %747 = vmatprep.subr.mxu0 0.0
    %748 = vmatpush1.msra.mxu0 0.0
    %749 = vmatprep.subr.mxu0 0.0
    %750 = vmatpush1.msra.mxu0 0.0
    %751 = vmatprep.subr.mxu0 0.0
    %752 = vmatpush1.msra.mxu0 0.0
    %753 = vmatprep.subr.mxu0 0.0
    %754 = vmatpush1.msra.mxu0 0.0
    %755 = vmatprep.subr.mxu0 0.0
    %756 = vmatpush1.msra.mxu0 0.0
    %757 = vmatprep.subr.mxu0 0.0
    %758 = vmatpush1.msra.mxu0 0.0
    %759 = vmatprep.subr.mxu0 0.0
    %760 = vmatpush1.msra.mxu0 %v424
    %761 = vmatprep.subr.mxu0 0.0
    %762 = vmatpush1.msra.mxu0 %v423
    %763 = vmatprep.subr.mxu0 0.0
    %764 = vmatpush2.msra.mxu0 0.0
    %765 = vmatprep.subr.mxu0 0.0
    %766 = vmatpush2.msra.mxu0 0.0
    %767 = vmatprep.subr.mxu0 0.0
    %768 = vmatpush2.msra.mxu0 0.0
    %769 = vmatprep.subr.mxu0 0.0
    %770 = vmatpush2.msra.mxu0 0.0
    %771 = vmatprep.subr.mxu0 0.0
    %772 = vmatpush2.msra.mxu0 0.0
    %773 = vmatprep.subr.mxu0 0.0
    %774 = vmatpush2.msra.mxu0 0.0
    %775 = vmatprep.subr.mxu0 0.0
    %776 = vmatpush2.msra.mxu0 0.0
    %777 = vmatprep.subr.mxu0 0.0
    %778 = vmatpush2.msra.mxu0 0.0
    %779 = vmatprep.subr.mxu0 0.0
    %780 = vmatpush2.msra.mxu0 0.0
    %781 = vmatprep.subr.mxu0 0.0
    %782 = vmatpush2.msra.mxu0 0.0
    %783 = vmatprep.subr.mxu0 0.0
    %784 = vmatpush2.msra.mxu0 0.0
    %785 = vmatprep.subr.mxu0 0.0
    %786 = vmatpush2.msra.mxu0 0.0
    %787 = vmatprep.subr.mxu0 0.0
    %788 = vmatpush2.msra.mxu0 0.0
    %789 = vmatprep.subr.mxu0 0.0
    %790 = vmatpush2.msra.mxu0 0.0
    %791 = vmatprep.subr.mxu0 0.0
    %792 = vmatpush2.msra.mxu0 0.0
    %793 = vmatprep.subr.mxu0 0.0
    %794 = vmatpush2.msra.mxu0 0.0
    %795 = vmatprep.mubr.f32.mxu0 0.0
    %796 = vmatmul.mubr.f32.gmra.mxu0 %v729
    %v797 = vpop.f32.mrf.mxu0
    %v798 = vadd.f32 %v430, %v797
    %v799 = vpop.f32.mrf.mxu0
    %800 = vdwg.mxu0
    %v801 = vmax.f32 %v798, 0.0
    %v803 = vsel %vm545, %v801, 0
    %805 = vmatprep.subr.mxu0 0.0
    %806 = vmatpush1.msra.mxu0 0.0
    %807 = vmatprep.subr.mxu0 0.0
    %808 = vmatpush1.msra.mxu0 0.0
    %809 = vmatprep.subr.mxu0 0.0
    %810 = vmatpush1.msra.mxu0 0.0
    %811 = vmatprep.subr.mxu0 0.0
    %812 = vmatpush1.msra.mxu0 0.0
    %813 = vmatprep.subr.mxu0 0.0
    %814 = vmatpush1.msra.mxu0 0.0
    %815 = vmatprep.subr.mxu0 0.0
    %816 = vmatpush1.msra.mxu0 0.0
    %817 = vmatprep.subr.mxu0 0.0
    %818 = vmatpush1.msra.mxu0 0.0
    %819 = vmatprep.subr.mxu0 0.0
    %820 = vmatpush1.msra.mxu0 0.0
    %821 = vmatprep.subr.mxu0 0.0
    %822 = vmatpush1.msra.mxu0 0.0
    %823 = vmatprep.subr.mxu0 0.0
    %824 = vmatpush1.msra.mxu0 0.0
    %825 = vmatprep.subr.mxu0 0.0
    %826 = vmatpush1.msra.mxu0 0.0
    %827 = vmatprep.subr.mxu0 0.0
    %828 = vmatpush1.msra.mxu0 0.0
    %829 = vmatprep.subr.mxu0 0.0
    %830 = vmatpush1.msra.mxu0 %v537
    %831 = vmatprep.subr.mxu0 0.0
    %832 = vmatpush1.msra.mxu0 %v536
    %833 = vmatprep.subr.mxu0 0.0
    %834 = vmatpush1.msra.mxu0 %v535
    %835 = vmatprep.subr.mxu0 0.0
    %836 = vmatpush1.msra.mxu0 %v534
    %837 = vmatprep.subr.mxu0 0.0
    %838 = vmatpush2.msra.mxu0 0.0
    %839 = vmatprep.subr.mxu0 0.0
    %840 = vmatpush2.msra.mxu0 0.0
    %841 = vmatprep.subr.mxu0 0.0
    %842 = vmatpush2.msra.mxu0 0.0
    %843 = vmatprep.subr.mxu0 0.0
    %844 = vmatpush2.msra.mxu0 0.0
    %845 = vmatprep.subr.mxu0 0.0
    %846 = vmatpush2.msra.mxu0 0.0
    %847 = vmatprep.subr.mxu0 0.0
    %848 = vmatpush2.msra.mxu0 0.0
    %849 = vmatprep.subr.mxu0 0.0
    %850 = vmatpush2.msra.mxu0 0.0
    %851 = vmatprep.subr.mxu0 0.0
    %852 = vmatpush2.msra.mxu0 0.0
    %853 = vmatprep.subr.mxu0 0.0
    %854 = vmatpush2.msra.mxu0 0.0
    %855 = vmatprep.subr.mxu0 0.0
    %856 = vmatpush2.msra.mxu0 0.0
    %857 = vmatprep.subr.mxu0 0.0
    %858 = vmatpush2.msra.mxu0 0.0
    %859 = vmatprep.subr.mxu0 0.0
    %860 = vmatpush2.msra.mxu0 0.0
    %861 = vmatprep.subr.mxu0 0.0
    %862 = vmatpush2.msra.mxu0 0.0
    %863 = vmatprep.subr.mxu0 0.0
    %864 = vmatpush2.msra.mxu0 0.0
    %865 = vmatprep.subr.mxu0 0.0
    %866 = vmatpush2.msra.mxu0 0.0
    %867 = vmatprep.subr.mxu0 0.0
    %868 = vmatpush2.msra.mxu0 0.0
    %869 = vmatprep.mubr.f32.mxu0 0.0
    %870 = vmatmul.mubr.f32.gmra.mxu0 %v803
    %v871 = vpop.f32.mrf.mxu0
    %v872 = vadd.f32 %v543, %v871
    %v873 = vpop.f32.mrf.mxu0
    %874 = vdwg.mxu0
    %v875 = vsub.f32 0.0, %v872
    %v876 = vmul.f32 %v875, 1.442695
    %v877 = vpow.pop %v876
    %v878 = vadd.f32 %v877, 1.0
    %v879 = vrcp.pop %v878
    %v880 = vmul.f32 1.0, %v879
    %v881 = vmul.f32 %v880, %v801
    %883 = vrot.lane.b32.xlu0 %v881, 32
    %v884 = vpop.permute.xlu0 %883
    %v886 = vsel %vm545, %v625, %v884
    %vm887 = vcmask 517120
    %888 = vst.msk [vmem:[#allocation2] sm:$0x3] %vm887, %v886
    // Predicated region
    $region34: #{tpu_custom_call.1} parent=1 // pred_check
      _
    $region35: #{tpu_custom_call.1} parent=1 // pred_check_branch
      %890 = sbr.rel (0) target = $region37
    $region36: #{tpu_custom_call.1} parent=1 // pred_region
      %s892 = ssub.s32 32, 32
      %893 = vsyncadd [#allocation3], %s892
      %s895 = sshll.u32 [#allocation2], 4
      %s896 = int_to_ptr.vmem [resolvable:$true] %s895
      %898 = dma.vmem_to_hbm [thread:$0]  %s896, 32, %s8, [#allocation3]
    $region37: #{tpu_custom_call.1} parent=1 // pred_fallthru
      _
    // Predicated region
    $region38: #{tpu_custom_call.1} parent=1 // pred_check
      _
    $region39: #{tpu_custom_call.1} parent=1 // pred_check_branch
      %900 = sbr.rel (0) target = $region41
    $region40: #{tpu_custom_call.1} parent=1 // pred_region
      %901 = dma.done [#allocation3], 32
    $region41: #{tpu_custom_call.1} parent=1 // pred_fallthru
      _
    %902 = vsyncpa [#allocation3], 1

</llo_original>
